<compile_context>
chip_gen: v7x
topology: tpu7x:2x2x1
jax: 0.10.0
libtpu: 0.0.40
codegen_flags: <defaults>
</compile_context>

<pallas_src>
import functools

import jax
import jax.numpy as jnp
import numpy as np
from jax.experimental import pallas as pl
from jax.experimental.pallas import tpu as pltpu


def _vmem_limit(nbytes):
    """Scoped-VMEM limit derived from actual buffer sizes (+ headroom)."""
    return int(min(128 * 1024 * 1024, max(16 * 1024 * 1024, nbytes + 4 * 1024 * 1024)))


def _normalize_weights(nbr_w):
    """Per-row sum-normalization (only if sum > 0), vectorized in the wrapper."""
    w = nbr_w.astype(jnp.float32)
    s = jnp.sum(w, axis=1, keepdims=True)
    return w / jnp.where(s > 0.0, s, 1.0)


# --------------------- path 1: weighted one-hot MXU matmul -------------------
def _onehot_matmul_kernel(s_ref, x_ref, o_ref, acc_ref):
    """Tiled S @ X on the MXU.  grid = (M tiles, N reduction tiles)."""
    @pl.when(pl.program_id(1) == 0)
    def _():
        acc_ref[...] = jnp.zeros_like(acc_ref)

    acc_ref[...] += jnp.dot(s_ref[...], x_ref[...],
                            preferred_element_type=jnp.float32)

    @pl.when(pl.program_id(1) == pl.num_programs(1) - 1)
    def _():
        o_ref[...] = acc_ref[...].astype(o_ref.dtype)


def _pool_matmul(x, nbr_idx, wnorm, *, block_m, block_n):
    n, d = x.shape
    m, k = nbr_idx.shape
    d_pad = int(pl.cdiv(d, 128)) * 128
    m_pad = int(pl.cdiv(m, block_m)) * block_m
    n_pad = int(pl.cdiv(n, block_n)) * block_n

    x_p = jnp.pad(x, ((0, n_pad - n), (0, d_pad - d)))

    # Scatter normalized weights into a dense [M_pad, N_pad] adjacency matrix.
    rows = jnp.broadcast_to(
        jnp.arange(m, dtype=jnp.int32)[:, None], (m, k)).reshape(-1)
    cols = nbr_idx.reshape(-1).astype(jnp.int32)
    s = (jnp.zeros((m_pad, n_pad), jnp.float32)
         .at[rows, cols].add(wnorm.reshape(-1))
         .astype(x.dtype))

    itm = jnp.dtype(x.dtype).itemsize
    vmem_bytes = (2 * block_m * block_n * itm      # S tiles (double-buffered)
                  + 2 * block_n * d_pad * itm      # x tiles
                  + 2 * block_m * d_pad * itm      # output tiles
                  + block_m * d_pad * 4)           # f32 accumulator scratch

    out = pl.pallas_call(
        _onehot_matmul_kernel,
        out_shape=jax.ShapeDtypeStruct((m_pad, d_pad), x.dtype),
        grid=(m_pad // block_m, n_pad // block_n),
        in_specs=[
            pl.BlockSpec((block_m, block_n), lambda i, j: (i, j)),   # S tile
            pl.BlockSpec((block_n, d_pad), lambda i, j: (j, 0)),     # x tile
        ],
        out_specs=pl.BlockSpec((block_m, d_pad), lambda i, j: (i, 0)),
        scratch_shapes=[pltpu.VMEM((block_m, d_pad), jnp.float32)],
        compiler_params=pltpu.CompilerParams(
            dimension_semantics=("parallel", "arbitrary"),
            vmem_limit_bytes=_vmem_limit(vmem_bytes),
        ),
    )(s, x_p)
    return out[:m, :d]


# ------------------- path 2: fused gather-accumulate (large N) ---------------
def _gather_pool_kernel(idx_ref, w_ref, x_ref, o_ref, *, k_max):
    """Fused gather + weighted reduce — no staging scratch.

    idx_ref : SMEM [M_pad*K] int32   flattened neighbor indices
    w_ref   : SMEM [M_pad*K] f32     flattened *normalized* weights
    x_ref   : VMEM [N, D_pad]        resident node-feature matrix
    o_ref   : VMEM [tm, D_pad]       pooled output tile
    """
    tm, d_pad = o_ref.shape
    row_base = pl.program_id(0) * tm

    def body(mi, carry):
        base = (row_base + mi) * k_max          # hoisted scalar offset
        acc = jnp.zeros((1, d_pad), jnp.float32)
        for kk in range(k_max):                 # K is small & static
            r = idx_ref[base + kk]              # scalar index (SMEM)
            w = w_ref[base + kk]                # scalar normalized weight (SMEM)
            acc = acc + w * x_ref[pl.ds(r, 1), :].astype(jnp.float32)
        o_ref[pl.ds(mi, 1), :] = acc.astype(o_ref.dtype)
        return carry

    jax.lax.fori_loop(0, tm, body, 0, unroll=8)


def _pool_gather(x, nbr_idx, wnorm, *, block_m):
    n, d = x.shape
    m, k = nbr_idx.shape
    d_pad = int(pl.cdiv(d, 128)) * 128
    m_pad = int(pl.cdiv(m, block_m)) * block_m

    x_p = jnp.pad(x, ((0, 0), (0, d_pad - d))) if d_pad != d else x
    idx_flat = jnp.pad(nbr_idx.astype(jnp.int32),
                       ((0, m_pad - m), (0, 0))).reshape(-1)
    w_flat = jnp.pad(wnorm, ((0, m_pad - m), (0, 0))).reshape(-1)

    itm = jnp.dtype(x.dtype).itemsize
    vmem_bytes = (2 * n * d_pad * itm             # resident x (auto double-buffered)
                  + 2 * block_m * d_pad * itm)    # output tiles
    # TODO(synk): for N too large for VMEM residency, stream x from HBM
    # (memory_space=pl.ANY + make_async_copy row gather, double-buffered) and
    # block idx/w per tile in SMEM for extremely large M.

    out = pl.pallas_call(
        functools.partial(_gather_pool_kernel, k_max=k),
        out_shape=jax.ShapeDtypeStruct((m_pad, d_pad), x.dtype),
        grid=(m_pad // block_m,),
        in_specs=[
            pl.BlockSpec(memory_space=pltpu.MemorySpace.SMEM),       # idx_flat
            pl.BlockSpec(memory_space=pltpu.MemorySpace.SMEM),       # w_flat
            pl.BlockSpec((n, d_pad), lambda i: (0, 0)),              # resident x
        ],
        out_specs=pl.BlockSpec((block_m, d_pad), lambda i: (i, 0)),
        compiler_params=pltpu.CompilerParams(
            dimension_semantics=("parallel",),
            vmem_limit_bytes=_vmem_limit(vmem_bytes),
        ),
    )(idx_flat, w_flat, x_p)
    return out[:m, :d]


# --------------------------------- dispatcher ---------------------------------
def importance_pooling(x, nbr_idx, nbr_w, *, block_m=128, block_n=256, path=None):
    """x: [N, D]; nbr_idx: [M, K] int32 (in-range); nbr_w: [M, K] -> [M, D].

    Invalid / padded neighbor slots must carry weight 0.0 (index value ignored).
    """
    n = x.shape[0]
    if path is None:
        # MXU one-hot matmul while x (and the [M,N] scatter) stay cheap;
        # fused row-gather for large N.
        path = "matmul" if n <= 4096 else "gather"
    wnorm = _normalize_weights(nbr_w)
    if path == "matmul":
        return _pool_matmul(x, nbr_idx, wnorm, block_m=block_m, block_n=block_n)
    return _pool_gather(x, nbr_idx, wnorm, block_m=block_m)


# ---------------- host-side glue: ragged lists -> dense padded arrays --------
def to_padded(neighbors, weights, num_nodes, k_max=None):
    """Replicates the module's filtering; invalid slots get index 0 / weight 0."""
    max_idx = num_nodes - 1
    rows_i, rows_w = [], []
    for nbrs, ws in zip(neighbors, weights):
        if isinstance(nbrs, (int, np.integer)):
            nbrs, ws = [nbrs], [1.0]
        ri, rw = [], []
        for j, idx in enumerate(nbrs):
            if isinstance(idx, (int, np.integer)) and idx <= max_idx:
                jdx = int(idx)
                if jdx < 0:
                    jdx += num_nodes            # torch/np negative indexing wraps
                if 0 <= jdx <= max_idx:
                    ri.append(jdx)
                    rw.append(float(ws[j]) if j < len(ws) else 1.0)
        rows_i.append(ri)
        rows_w.append(rw)
    if k_max is None:
        k_max = max([len(r) for r in rows_i] + [1])   # never truncate valid slots
    idx_pad = np.zeros((len(rows_i), k_max), np.int32)
    w_pad = np.zeros((len(rows_i), k_max), np.float32)
    for i, (ri, rw) in enumerate(zip(rows_i, rows_w)):
        ln = min(len(ri), k_max)
        idx_pad[i, :ln] = ri[:ln]
        w_pad[i, :ln] = rw[:ln]
    return idx_pad, w_pad


# ---------------- pure-numpy reference replicating the torch forward ---------
def reference(x, neighbors, weights):
    x = np.asarray(x)
    pooled = []
    max_idx = x.shape[0] - 1
    for nbrs, ws in zip(neighbors, weights):
        if isinstance(nbrs, (int, np.integer)):
            nbrs, ws = [nbrs], [1.0]
        if not nbrs:
            pooled.append(np.zeros_like(x[0]))
            continue
        vi, vw = [], []
        for j, idx in enumerate(nbrs):
            if isinstance(idx, (int, np.integer)) and idx <= max_idx:
                vi.append(idx)
                vw.append(ws[j] if j < len(ws) else 1.0)
        if not vi:
            pooled.append(np.zeros_like(x[0]))
            continue
        feats = x[vi]                                 # negative idx wraps, like torch
        wt = np.asarray(vw, np.float32).reshape(-1, 1)
        s = wt.sum()
        if s > 0:
            wt = wt / s
        pooled.append((feats * wt).sum(axis=0))
    return np.stack(pooled)


if __name__ == "__main__":
    # small synthetic problem: N=12 source nodes, D=32 features,
    # M=18 query nodes, K=4 max neighbors per query node.
    N, D, K = 12, 32, 4
    key = jax.random.PRNGKey(0)
    x = jax.random.normal(key, (N, D), dtype=jnp.float32)

    # deterministic ragged neighbor structure exercising all code paths:
    neighbors = [
        [0, 1, 2],          # normal
        [3, 4],             # normal
        5,                  # bare int neighbor -> weight 1.0
        [],                 # empty -> zero row
        [999, 1000],        # all invalid (> max_idx) -> zero row
        [6, 999, 7],        # mix of valid / invalid
        [8, 9, 10, 11],     # full K
        [2],                # single
        [0, 0, 1],          # repeated indices
        [11, 10],           # normal
        [1, 3, 5, 7],       # full K
        [4, 6],             # weights list shorter -> default 1.0 for slot 1
        [9],                # single
        [2, 8],             # normal
        [],                 # empty again
        [5, 11, 0],         # normal
        [-1, 3],            # negative index -> wraps to x[N-1] (torch semantics)
        [0, 11],            # normal
    ]
    weights = [
        [0.5, 0.3, 0.2],
        [1.0, 2.0],
        [1.0],
        [],
        [0.4, 0.6],
        [0.7, 0.1, 0.2],
        [0.1, 0.2, 0.3, 0.4],
        [2.5],
        [0.25, 0.25, 0.5],
        [1.5, 0.5],
        [1.0, 1.0, 1.0, 1.0],
        [0.9],                  # shorter than neighbor list on purpose
        [3.0],
        [0.6, 0.4],
        [],
        [0.2, 0.3, 0.5],
        [0.25, 0.75],
        [2.0, 1.0],
    ]

    nbr_idx_np, nbr_w_np = to_padded(neighbors, weights, num_nodes=N, k_max=K)
    nbr_idx = jnp.asarray(nbr_idx_np)
    nbr_w = jnp.asarray(nbr_w_np)

    ref = reference(np.asarray(x), neighbors, weights)

    # default path for this size: one-hot MXU matmul
    out_mm = importance_pooling(x, nbr_idx, nbr_w, path="matmul")
    out_mm = jax.block_until_ready(out_mm)
    np.testing.assert_allclose(np.asarray(out_mm), ref, rtol=1e-5, atol=1e-5)

    # large-N fallback path: fused gather-accumulate (verified at same shapes)
    out_g = importance_pooling(x, nbr_idx, nbr_w, path="gather")
    out_g = jax.block_until_ready(out_g)
    np.testing.assert_allclose(np.asarray(out_g), ref, rtol=1e-5, atol=1e-5)

    print("KERNEL_OK")
</pallas_src>

<mosaic_0001>
module attributes {stable_mosaic.version = 11 : i64} {
  func.func @_onehot_matmul_kernel(%arg0: i32, %arg1: i32, %arg2: memref<128x256xf32, #tpu.memory_space<vmem>>, %arg3: memref<256x128xf32, #tpu.memory_space<vmem>>, %arg4: memref<128x128xf32, #tpu.memory_space<vmem>>, %arg5: memref<128x128xf32, #tpu.memory_space<vmem>>) attributes {dimension_semantics = [#tpu.dimension_semantics<parallel>, #tpu.dimension_semantics<arbitrary>], iteration_bounds = array<i64: 1, 1>, scalar_prefetch = 0 : i64, scratch_operands = 1 : i64, tpu.core_type = #tpu.core_type<tc>, window_params = [{transform_indices = @transform_0, window_bounds = array<i64: 128, 256>}, {transform_indices = @transform_1, window_bounds = array<i64: 256, 128>}, {transform_indices = @transform_2, window_bounds = array<i64: 128, 128>}]} {
    %c0_i32 = arith.constant 0 : i32
    %0 = arith.cmpi eq, %arg1, %c0_i32 : i32
    %1 = arith.extui %0 : i1 to i32
    %c0_i32_0 = arith.constant 0 : i32
    %2 = arith.cmpi ne, %1, %c0_i32_0 : i32
    scf.if %2 {
      %cst_10 = arith.constant 0.000000e+00 : f32
      %12 = vector.broadcast %cst_10 : f32 to vector<128x128xf32>
      %c0_11 = arith.constant 0 : index
      %c0_12 = arith.constant 0 : index
      %13 = vector.load %arg5[%c0_11, %c0_12] : memref<128x128xf32, #tpu.memory_space<vmem>>, vector<128x128xf32>
      tpu.vector_store %arg5[%c0_11, %c0_12], %12 {strides = array<i32>} : memref<128x128xf32, #tpu.memory_space<vmem>>, vector<128x128xf32>,
    } else {
    }
    %c0 = arith.constant 0 : index
    %c0_1 = arith.constant 0 : index
    %3 = vector.load %arg5[%c0, %c0_1] : memref<128x128xf32, #tpu.memory_space<vmem>>, vector<128x128xf32>
    %c0_2 = arith.constant 0 : index
    %c0_3 = arith.constant 0 : index
    %4 = vector.load %arg2[%c0_2, %c0_3] : memref<128x256xf32, #tpu.memory_space<vmem>>, vector<128x256xf32>
    %c0_4 = arith.constant 0 : index
    %c0_5 = arith.constant 0 : index
    %5 = vector.load %arg3[%c0_4, %c0_5] : memref<256x128xf32, #tpu.memory_space<vmem>>, vector<256x128xf32>
    %cst = arith.constant dense<0.000000e+00> : vector<128x128xf32>
    %6 = tpu.matmul %4, %5, %cst {dimension_numbers = #tpu.dot_dimension_numbers<[1], [0], [0], [1], [0, 0, 1, 1], [], []>} : vector<128x256xf32>, vector<256x128xf32>, vector<128x128xf32> -> vector<128x128xf32>
    %7 = arith.addf %3, %6 : vector<128x128xf32>
    %c0_6 = arith.constant 0 : index
    %c0_7 = arith.constant 0 : index
    %8 = vector.load %arg5[%c0_6, %c0_7] : memref<128x128xf32, #tpu.memory_space<vmem>>, vector<128x128xf32>
    tpu.vector_store %arg5[%c0_6, %c0_7], %7 {strides = array<i32>} : memref<128x128xf32, #tpu.memory_space<vmem>>, vector<128x128xf32>,
    %c0_i32_8 = arith.constant 0 : i32
    %9 = arith.cmpi eq, %arg1, %c0_i32_8 : i32
    %10 = arith.extui %9 : i1 to i32
    %c0_i32_9 = arith.constant 0 : i32
    %11 = arith.cmpi ne, %10, %c0_i32_9 : i32
    scf.if %11 {
      %c0_10 = arith.constant 0 : index
      %c0_11 = arith.constant 0 : index
      %12 = vector.load %arg5[%c0_10, %c0_11] : memref<128x128xf32, #tpu.memory_space<vmem>>, vector<128x128xf32>
      %c0_12 = arith.constant 0 : index
      %c0_13 = arith.constant 0 : index
      %13 = vector.load %arg4[%c0_12, %c0_13] : memref<128x128xf32, #tpu.memory_space<vmem>>, vector<128x128xf32>
      tpu.vector_store %arg4[%c0_12, %c0_13], %12 {strides = array<i32>} : memref<128x128xf32, #tpu.memory_space<vmem>>, vector<128x128xf32>,
    } else {
    }
    return
  }
  func.func @transform_0(%arg0: i32, %arg1: i32) -> (i32, i32) {
    %c0_i32 = arith.constant 0 : i32
    return %arg0, %arg1 : i32, i32
  }
  func.func @transform_1(%arg0: i32, %arg1: i32) -> (i32, i32) {
    %c0_i32 = arith.constant 0 : i32
    %c0_i32_0 = arith.constant 0 : i32
    return %arg1, %c0_i32 : i32, i32
  }
  func.func @transform_2(%arg0: i32, %arg1: i32) -> (i32, i32) {
    %c0_i32 = arith.constant 0 : i32
    %c0_i32_0 = arith.constant 0 : i32
    return %arg0, %c0_i32 : i32, i32
  }
}

</mosaic_0001>

<llo_original>
// kernel: tpu_custom_call.1
$region0: #{tpu_custom_call.1}
  #allocation0 [shape = 'u32[]', space=smem, size = 0x4, offset = 0x4, fixed_abs, tag = 'smem constant byte address 0x4 - core index']
  #allocation1 [shape = 'u32[144,128]{1,0:T(1,128)}', space=vmem, size = 0x12000, scoped, tag = 'internal scratch']
  #allocation2 [shape = 'f32[128,128]{1,0:T(8,128)}', space=vmem, size = 0x10000, scoped, tag = 'scratch operand']
  %s0 = inlined_call_operand.hbm [shape: f32[128,256], index: 0, kind: input, shape index: {}]
  %s1 = inlined_call_operand.hbm [shape: f32[256,128], index: 1, kind: input, shape index: {}]
  %s2 = inlined_call_operand.hbm [shape: f32[128,128], index: 2, kind: output, shape index: {}]
  %s3 = sld [smem:[#allocation0]]
  $region34: #{tpu_custom_call.1} parent=0
    _
  %s5 = ssub.s32 1, %s3
  %s6 = scalar_select 0, %s5, %s3
  $region1: #{tpu_custom_call.1} parent=0
    #allocation3 [shape = 'u8[131072]{0}', space=vmem, size = 0x20000, scoped, tag = 'input window, operand 0, single buffered']
    #allocation4 [shape = 's32[1]{0}', space=sflag, size = 0x4, scoped, tag = 'scoped memory for tpu_custom_call.1']
    #allocation5 [shape = 's32[1]{0}', space=sflag, size = 0x4, scoped, tag = 'scoped memory for tpu_custom_call.1']
    #allocation6 [shape = 'u8[131072]{0}', space=vmem, size = 0x20000, scoped, tag = 'input window, operand 1, single buffered']
    #allocation7 [shape = 's32[1]{0}', space=sflag, size = 0x4, scoped, tag = 'scoped memory for tpu_custom_call.1']
    #allocation8 [shape = 'u8[65536]{0}', space=vmem, size = 0x10000, scoped, tag = 'output window, operand 0, single buffered']
    %7 = vsyncpa [#allocation4], 0
    %8 = vsyncpa [#allocation7], 0
    %9 = vsyncpa [#allocation5], 0
    // Predicated region
    $region2: #{tpu_custom_call.1} parent=1 // pred_check
      _
    $region3: #{tpu_custom_call.1} parent=1 // pred_check_branch
      %11 = sbr.rel (0) target = $region5
    $region4: #{tpu_custom_call.1} parent=1 // pred_region
      %s13 = ssub.s32 4096, 4096
      %14 = vsyncadd [#allocation4], %s13
      %s15 = sshll.u32 [#allocation3], 4
      %s16 = int_to_ptr.vmem [resolvable:$true] %s15
      %21 = dma.hbm_to_vmem [thread:$0]  %s0, 4096, %s16, [#allocation4], 256, 256, 16
    $region5: #{tpu_custom_call.1} parent=1 // pred_fallthru
      _
    // Predicated region
    $region6: #{tpu_custom_call.1} parent=1 // pred_check
      _
    $region7: #{tpu_custom_call.1} parent=1 // pred_check_branch
      %23 = sbr.rel (0) target = $region9
    $region8: #{tpu_custom_call.1} parent=1 // pred_region
      %s25 = ssub.s32 4096, 4096
      %26 = vsyncadd [#allocation7], %s25
      %s27 = sshll.u32 [#allocation6], 4
      %s28 = int_to_ptr.vmem [resolvable:$true] %s27
      %33 = dma.hbm_to_vmem [thread:$0]  %s1, 4096, %s28, [#allocation7], 128, 128, 8
    $region9: #{tpu_custom_call.1} parent=1 // pred_fallthru
      _
    // Predicated region
    $region10: #{tpu_custom_call.1} parent=1 // pred_check
      _
    $region11: #{tpu_custom_call.1} parent=1 // pred_check_branch
      %35 = sbr.rel (0) target = $region13
    $region12: #{tpu_custom_call.1} parent=1 // pred_region
      %36 = dma.done [#allocation4], 4096
    $region13: #{tpu_custom_call.1} parent=1 // pred_fallthru
      _
    // Predicated region
    $region14: #{tpu_custom_call.1} parent=1 // pred_check
      _
    $region15: #{tpu_custom_call.1} parent=1 // pred_check_branch
      %38 = sbr.rel (0) target = $region17
    $region16: #{tpu_custom_call.1} parent=1 // pred_region
      %39 = dma.done [#allocation7], 4096
    $region17: #{tpu_custom_call.1} parent=1 // pred_fallthru
      _
    %p40 = scmp.eq.s32.totalorder 0, 0
    // Predicated region
    $region18: #{tpu_custom_call.1} parent=1 // pred_check
      %p41 = pneg %p40
    $region19: #{tpu_custom_call.1} parent=1 // pred_check_branch
      %43 = sbr.rel (%p41) target = $region21
    $region20: #{tpu_custom_call.1} parent=1 // pred_region
      %44 = vst [vmem:[#allocation2] sm:$0xff] 0.0
      %45 = vst [vmem:[#allocation2 + $0x8] sm:$0xff] 0.0
      %46 = vst [vmem:[#allocation2 + $0x10] sm:$0xff] 0.0
      %47 = vst [vmem:[#allocation2 + $0x18] sm:$0xff] 0.0
      %48 = vst [vmem:[#allocation2 + $0x20] sm:$0xff] 0.0
      %49 = vst [vmem:[#allocation2 + $0x28] sm:$0xff] 0.0
      %50 = vst [vmem:[#allocation2 + $0x30] sm:$0xff] 0.0
      %51 = vst [vmem:[#allocation2 + $0x38] sm:$0xff] 0.0
      %52 = vst [vmem:[#allocation2 + $0x40] sm:$0xff] 0.0
      %53 = vst [vmem:[#allocation2 + $0x48] sm:$0xff] 0.0
      %54 = vst [vmem:[#allocation2 + $0x50] sm:$0xff] 0.0
      %55 = vst [vmem:[#allocation2 + $0x58] sm:$0xff] 0.0
      %56 = vst [vmem:[#allocation2 + $0x60] sm:$0xff] 0.0
      %57 = vst [vmem:[#allocation2 + $0x68] sm:$0xff] 0.0
      %58 = vst [vmem:[#allocation2 + $0x70] sm:$0xff] 0.0
      %59 = vst [vmem:[#allocation2 + $0x78] sm:$0xff] 0.0
    $region21: #{tpu_custom_call.1} parent=1 // pred_fallthru
      _
    %v60 = vld [vmem:[#allocation2] sm:$0xff]
    %v61 = vld [vmem:[#allocation2 + $0x8] sm:$0xff]
    %v62 = vld [vmem:[#allocation2 + $0x10] sm:$0xff]
    %v63 = vld [vmem:[#allocation2 + $0x18] sm:$0xff]
    %v64 = vld [vmem:[#allocation2 + $0x20] sm:$0xff]
    %v65 = vld [vmem:[#allocation2 + $0x28] sm:$0xff]
    %v66 = vld [vmem:[#allocation2 + $0x30] sm:$0xff]
    %v67 = vld [vmem:[#allocation2 + $0x38] sm:$0xff]
    %v68 = vld [vmem:[#allocation2 + $0x40] sm:$0xff]
    %v69 = vld [vmem:[#allocation2 + $0x48] sm:$0xff]
    %v70 = vld [vmem:[#allocation2 + $0x50] sm:$0xff]
    %v71 = vld [vmem:[#allocation2 + $0x58] sm:$0xff]
    %v72 = vld [vmem:[#allocation2 + $0x60] sm:$0xff]
    %v73 = vld [vmem:[#allocation2 + $0x68] sm:$0xff]
    %v74 = vld [vmem:[#allocation2 + $0x70] sm:$0xff]
    %v75 = vld [vmem:[#allocation2 + $0x78] sm:$0xff]
    %v76 = vld [vmem:[#allocation3] sm:$0xff]
    %v77 = vld [vmem:[#allocation3 + $0x8] sm:$0xff]
    %v78 = vld [vmem:[#allocation3 + $0x10] sm:$0xff]
    %v79 = vld [vmem:[#allocation3 + $0x18] sm:$0xff]
    %v80 = vld [vmem:[#allocation3 + $0x20] sm:$0xff]
    %v81 = vld [vmem:[#allocation3 + $0x28] sm:$0xff]
    %v82 = vld [vmem:[#allocation3 + $0x30] sm:$0xff]
    %v83 = vld [vmem:[#allocation3 + $0x38] sm:$0xff]
    %v84 = vld [vmem:[#allocation3 + $0x40] sm:$0xff]
    %v85 = vld [vmem:[#allocation3 + $0x48] sm:$0xff]
    %v86 = vld [vmem:[#allocation3 + $0x50] sm:$0xff]
    %v87 = vld [vmem:[#allocation3 + $0x58] sm:$0xff]
    %v88 = vld [vmem:[#allocation3 + $0x60] sm:$0xff]
    %v89 = vld [vmem:[#allocation3 + $0x68] sm:$0xff]
    %v90 = vld [vmem:[#allocation3 + $0x70] sm:$0xff]
    %v91 = vld [vmem:[#allocation3 + $0x78] sm:$0xff]
    %v92 = vld [vmem:[#allocation3 + $0x80] sm:$0xff]
    %v93 = vld [vmem:[#allocation3 + $0x88] sm:$0xff]
    %v94 = vld [vmem:[#allocation3 + $0x90] sm:$0xff]
    %v95 = vld [vmem:[#allocation3 + $0x98] sm:$0xff]
    %v96 = vld [vmem:[#allocation3 + $0xa0] sm:$0xff]
    %v97 = vld [vmem:[#allocation3 + $0xa8] sm:$0xff]
    %v98 = vld [vmem:[#allocation3 + $0xb0] sm:$0xff]
    %v99 = vld [vmem:[#allocation3 + $0xb8] sm:$0xff]
    %v100 = vld [vmem:[#allocation3 + $0xc0] sm:$0xff]
    %v101 = vld [vmem:[#allocation3 + $0xc8] sm:$0xff]
    %v102 = vld [vmem:[#allocation3 + $0xd0] sm:$0xff]
    %v103 = vld [vmem:[#allocation3 + $0xd8] sm:$0xff]
    %v104 = vld [vmem:[#allocation3 + $0xe0] sm:$0xff]
    %v105 = vld [vmem:[#allocation3 + $0xe8] sm:$0xff]
    %v106 = vld [vmem:[#allocation3 + $0xf0] sm:$0xff]
    %v107 = vld [vmem:[#allocation3 + $0xf8] sm:$0xff]
    %v108 = vld [vmem:[#allocation6] sm:$0xff]
    %v109 = vld [vmem:[#allocation6 + $0x8] sm:$0xff]
    %v110 = vld [vmem:[#allocation6 + $0x10] sm:$0xff]
    %v111 = vld [vmem:[#allocation6 + $0x18] sm:$0xff]
    %v112 = vld [vmem:[#allocation6 + $0x20] sm:$0xff]
    %v113 = vld [vmem:[#allocation6 + $0x28] sm:$0xff]
    %v114 = vld [vmem:[#allocation6 + $0x30] sm:$0xff]
    %v115 = vld [vmem:[#allocation6 + $0x38] sm:$0xff]
    %v116 = vld [vmem:[#allocation6 + $0x40] sm:$0xff]
    %v117 = vld [vmem:[#allocation6 + $0x48] sm:$0xff]
    %v118 = vld [vmem:[#allocation6 + $0x50] sm:$0xff]
    %v119 = vld [vmem:[#allocation6 + $0x58] sm:$0xff]
    %v120 = vld [vmem:[#allocation6 + $0x60] sm:$0xff]
    %v121 = vld [vmem:[#allocation6 + $0x68] sm:$0xff]
    %v122 = vld [vmem:[#allocation6 + $0x70] sm:$0xff]
    %v123 = vld [vmem:[#allocation6 + $0x78] sm:$0xff]
    %v124 = vld [vmem:[#allocation6 + $0x80] sm:$0xff]
    %v125 = vld [vmem:[#allocation6 + $0x88] sm:$0xff]
    %v126 = vld [vmem:[#allocation6 + $0x90] sm:$0xff]
    %v127 = vld [vmem:[#allocation6 + $0x98] sm:$0xff]
    %v128 = vld [vmem:[#allocation6 + $0xa0] sm:$0xff]
    %v129 = vld [vmem:[#allocation6 + $0xa8] sm:$0xff]
    %v130 = vld [vmem:[#allocation6 + $0xb0] sm:$0xff]
    %v131 = vld [vmem:[#allocation6 + $0xb8] sm:$0xff]
    %v132 = vld [vmem:[#allocation6 + $0xc0] sm:$0xff]
    %v133 = vld [vmem:[#allocation6 + $0xc8] sm:$0xff]
    %v134 = vld [vmem:[#allocation6 + $0xd0] sm:$0xff]
    %v135 = vld [vmem:[#allocation6 + $0xd8] sm:$0xff]
    %v136 = vld [vmem:[#allocation6 + $0xe0] sm:$0xff]
    %v137 = vld [vmem:[#allocation6 + $0xe8] sm:$0xff]
    %v138 = vld [vmem:[#allocation6 + $0xf0] sm:$0xff]
    %v139 = vld [vmem:[#allocation6 + $0xf8] sm:$0xff]
    %140 = vmatprep.subr.mxu0 0.0
    %141 = vmatpush1.msra.mxu0 %v108
    %142 = vmatprep.subr.mxu0 0.0
    %143 = vmatpush1.msra.mxu0 %v109
    %144 = vmatprep.subr.mxu0 0.0
    %145 = vmatpush1.msra.mxu0 %v110
    %146 = vmatprep.subr.mxu0 0.0
    %147 = vmatpush1.msra.mxu0 %v111
    %148 = vmatprep.subr.mxu0 0.0
    %149 = vmatpush1.msra.mxu0 %v112
    %150 = vmatprep.subr.mxu0 0.0
    %151 = vmatpush1.msra.mxu0 %v113
    %152 = vmatprep.subr.mxu0 0.0
    %153 = vmatpush1.msra.mxu0 %v114
    %154 = vmatprep.subr.mxu0 0.0
    %155 = vmatpush1.msra.mxu0 %v115
    %156 = vmatprep.subr.mxu0 0.0
    %157 = vmatpush1.msra.mxu0 %v116
    %158 = vmatprep.subr.mxu0 0.0
    %159 = vmatpush1.msra.mxu0 %v117
    %160 = vmatprep.subr.mxu0 0.0
    %161 = vmatpush1.msra.mxu0 %v118
    %162 = vmatprep.subr.mxu0 0.0
    %163 = vmatpush1.msra.mxu0 %v119
    %164 = vmatprep.subr.mxu0 0.0
    %165 = vmatpush1.msra.mxu0 %v120
    %166 = vmatprep.subr.mxu0 0.0
    %167 = vmatpush1.msra.mxu0 %v121
    %168 = vmatprep.subr.mxu0 0.0
    %169 = vmatpush1.msra.mxu0 %v122
    %170 = vmatprep.subr.mxu0 0.0
    %171 = vmatpush1.msra.mxu0 %v123
    %172 = vmatprep.subr.mxu0 0.0
    %173 = vmatpush1.msra.mxu0 %v124
    %174 = vmatprep.subr.mxu0 0.0
    %175 = vmatpush1.msra.mxu0 %v125
    %176 = vmatprep.subr.mxu0 0.0
    %177 = vmatpush1.msra.mxu0 %v126
    %178 = vmatprep.subr.mxu0 0.0
    %179 = vmatpush1.msra.mxu0 %v127
    %180 = vmatprep.subr.mxu0 0.0
    %181 = vmatpush1.msra.mxu0 %v128
    %182 = vmatprep.subr.mxu0 0.0
    %183 = vmatpush1.msra.mxu0 %v129
    %184 = vmatprep.subr.mxu0 0.0
    %185 = vmatpush1.msra.mxu0 %v130
    %186 = vmatprep.subr.mxu0 0.0
    %187 = vmatpush1.msra.mxu0 %v131
    %188 = vmatprep.subr.mxu0 0.0
    %189 = vmatpush1.msra.mxu0 %v132
    %190 = vmatprep.subr.mxu0 0.0
    %191 = vmatpush1.msra.mxu0 %v133
    %192 = vmatprep.subr.mxu0 0.0
    %193 = vmatpush1.msra.mxu0 %v134
    %194 = vmatprep.subr.mxu0 0.0
    %195 = vmatpush1.msra.mxu0 %v135
    %196 = vmatprep.subr.mxu0 0.0
    %197 = vmatpush1.msra.mxu0 %v136
    %198 = vmatprep.subr.mxu0 0.0
    %199 = vmatpush1.msra.mxu0 %v137
    %200 = vmatprep.subr.mxu0 0.0
    %201 = vmatpush1.msra.mxu0 %v138
    %202 = vmatprep.subr.mxu0 0.0
    %203 = vmatpush1.msra.mxu0 %v139
    %204 = vmatprep.mubr.f32.mxu0 %v77
    %205 = vmatmul.mubr.f32.gmra.mrb[0].mxu0 %v76
    %v206 = vpop.f32.mrb[0].mxu0
    %v207 = vadd.f32 0.0, %v206
    %v208 = vpop.f32.mrb[0].mxu0
    %209 = vmatprep.mubr.f32.mxu0 %v79
    %210 = vmatmul.mubr.f32.gmra.mrb[0].mxu0 %v78
    %v211 = vpop.f32.mrb[0].mxu0
    %v212 = vadd.f32 0.0, %v211
    %v213 = vpop.f32.mrb[0].mxu0
    %214 = vmatprep.mubr.f32.mxu0 %v81
    %215 = vmatmul.mubr.f32.gmra.mrb[0].mxu0 %v80
    %v216 = vpop.f32.mrb[0].mxu0
    %v217 = vadd.f32 0.0, %v216
    %v218 = vpop.f32.mrb[0].mxu0
    %219 = vmatprep.mubr.f32.mxu0 %v83
    %220 = vmatmul.mubr.f32.gmra.mrb[0].mxu0 %v82
    %v221 = vpop.f32.mrb[0].mxu0
    %v222 = vadd.f32 0.0, %v221
    %v223 = vpop.f32.mrb[0].mxu0
    %224 = vmatprep.mubr.f32.mxu0 %v85
    %225 = vmatmul.mubr.f32.gmra.mrb[0].mxu0 %v84
    %v226 = vpop.f32.mrb[0].mxu0
    %v227 = vadd.f32 0.0, %v226
    %v228 = vpop.f32.mrb[0].mxu0
    %229 = vmatprep.mubr.f32.mxu0 %v87
    %230 = vmatmul.mubr.f32.gmra.mrb[0].mxu0 %v86
    %v231 = vpop.f32.mrb[0].mxu0
    %v232 = vadd.f32 0.0, %v231
    %v233 = vpop.f32.mrb[0].mxu0
    %234 = vmatprep.mubr.f32.mxu0 %v89
    %235 = vmatmul.mubr.f32.gmra.mrb[0].mxu0 %v88
    %v236 = vpop.f32.mrb[0].mxu0
    %v237 = vadd.f32 0.0, %v236
    %v238 = vpop.f32.mrb[0].mxu0
    %239 = vmatprep.mubr.f32.mxu0 %v91
    %240 = vmatmul.mubr.f32.gmra.mrb[0].mxu0 %v90
    %v241 = vpop.f32.mrb[0].mxu0
    %v242 = vadd.f32 0.0, %v241
    %v243 = vpop.f32.mrb[0].mxu0
    %244 = vmatprep.mubr.f32.mxu0 %v93
    %245 = vmatmul.mubr.f32.gmra.mrb[0].mxu0 %v92
    %v246 = vpop.f32.mrb[0].mxu0
    %v247 = vadd.f32 0.0, %v246
    %v248 = vpop.f32.mrb[0].mxu0
    %249 = vmatprep.mubr.f32.mxu0 %v95
    %250 = vmatmul.mubr.f32.gmra.mrb[0].mxu0 %v94
    %v251 = vpop.f32.mrb[0].mxu0
    %v252 = vadd.f32 0.0, %v251
    %v253 = vpop.f32.mrb[0].mxu0
    %254 = vmatprep.mubr.f32.mxu0 %v97
    %255 = vmatmul.mubr.f32.gmra.mrb[0].mxu0 %v96
    %v256 = vpop.f32.mrb[0].mxu0
    %v257 = vadd.f32 0.0, %v256
    %v258 = vpop.f32.mrb[0].mxu0
    %259 = vmatprep.mubr.f32.mxu0 %v99
    %260 = vmatmul.mubr.f32.gmra.mrb[0].mxu0 %v98
    %v261 = vpop.f32.mrb[0].mxu0
    %v262 = vadd.f32 0.0, %v261
    %v263 = vpop.f32.mrb[0].mxu0
    %264 = vmatprep.mubr.f32.mxu0 %v101
    %265 = vmatmul.mubr.f32.gmra.mrb[0].mxu0 %v100
    %v266 = vpop.f32.mrb[0].mxu0
    %v267 = vadd.f32 0.0, %v266
    %v268 = vpop.f32.mrb[0].mxu0
    %269 = vmatprep.mubr.f32.mxu0 %v103
    %270 = vmatmul.mubr.f32.gmra.mrb[0].mxu0 %v102
    %v271 = vpop.f32.mrb[0].mxu0
    %v272 = vadd.f32 0.0, %v271
    %v273 = vpop.f32.mrb[0].mxu0
    %274 = vmatprep.mubr.f32.mxu0 %v105
    %275 = vmatmul.mubr.f32.gmra.mrb[0].mxu0 %v104
    %v276 = vpop.f32.mrb[0].mxu0
    %v277 = vadd.f32 0.0, %v276
    %v278 = vpop.f32.mrb[0].mxu0
    %279 = vmatprep.mubr.f32.mxu0 %v107
    %280 = vmatmul.mubr.f32.gmra.mrb[0].mxu0 %v106
    %v281 = vpop.f32.mrb[0].mxu0
    %v282 = vadd.f32 0.0, %v281
    %v283 = vpop.f32.mrb[0].mxu0
    %284 = vdwg.mxu0
    %v285 = vadd.f32 %v60, %v207
    %v286 = vadd.f32 %v61, %v212
    %v287 = vadd.f32 %v62, %v217
    %v288 = vadd.f32 %v63, %v222
    %v289 = vadd.f32 %v64, %v227
    %v290 = vadd.f32 %v65, %v232
    %v291 = vadd.f32 %v66, %v237
    %v292 = vadd.f32 %v67, %v242
    %v293 = vadd.f32 %v68, %v247
    %v294 = vadd.f32 %v69, %v252
    %v295 = vadd.f32 %v70, %v257
    %v296 = vadd.f32 %v71, %v262
    %v297 = vadd.f32 %v72, %v267
    %v298 = vadd.f32 %v73, %v272
    %v299 = vadd.f32 %v74, %v277
    %v300 = vadd.f32 %v75, %v282
    %301 = vst [vmem:[#allocation2] sm:$0xff] %v285
    %302 = vst [vmem:[#allocation2 + $0x8] sm:$0xff] %v286
    %303 = vst [vmem:[#allocation2 + $0x10] sm:$0xff] %v287
    %304 = vst [vmem:[#allocation2 + $0x18] sm:$0xff] %v288
    %305 = vst [vmem:[#allocation2 + $0x20] sm:$0xff] %v289
    %306 = vst [vmem:[#allocation2 + $0x28] sm:$0xff] %v290
    %307 = vst [vmem:[#allocation2 + $0x30] sm:$0xff] %v291
    %308 = vst [vmem:[#allocation2 + $0x38] sm:$0xff] %v292
    %309 = vst [vmem:[#allocation2 + $0x40] sm:$0xff] %v293
    %310 = vst [vmem:[#allocation2 + $0x48] sm:$0xff] %v294
    %311 = vst [vmem:[#allocation2 + $0x50] sm:$0xff] %v295
    %312 = vst [vmem:[#allocation2 + $0x58] sm:$0xff] %v296
    %313 = vst [vmem:[#allocation2 + $0x60] sm:$0xff] %v297
    %314 = vst [vmem:[#allocation2 + $0x68] sm:$0xff] %v298
    %315 = vst [vmem:[#allocation2 + $0x70] sm:$0xff] %v299
    %316 = vst [vmem:[#allocation2 + $0x78] sm:$0xff] %v300
    // Predicated region
    $region22: #{tpu_custom_call.1} parent=1 // pred_check
      %p317 = pneg %p40
    $region23: #{tpu_custom_call.1} parent=1 // pred_check_branch
      %319 = sbr.rel (%p317) target = $region25
    $region24: #{tpu_custom_call.1} parent=1 // pred_region
      %v320 = vld [vmem:[#allocation2] sm:$0xff]
      %v321 = vld [vmem:[#allocation2 + $0x8] sm:$0xff]
      %v322 = vld [vmem:[#allocation2 + $0x10] sm:$0xff]
      %v323 = vld [vmem:[#allocation2 + $0x18] sm:$0xff]
      %v324 = vld [vmem:[#allocation2 + $0x20] sm:$0xff]
      %v325 = vld [vmem:[#allocation2 + $0x28] sm:$0xff]
      %v326 = vld [vmem:[#allocation2 + $0x30] sm:$0xff]
      %v327 = vld [vmem:[#allocation2 + $0x38] sm:$0xff]
      %v328 = vld [vmem:[#allocation2 + $0x40] sm:$0xff]
      %v329 = vld [vmem:[#allocation2 + $0x48] sm:$0xff]
      %v330 = vld [vmem:[#allocation2 + $0x50] sm:$0xff]
      %v331 = vld [vmem:[#allocation2 + $0x58] sm:$0xff]
      %v332 = vld [vmem:[#allocation2 + $0x60] sm:$0xff]
      %v333 = vld [vmem:[#allocation2 + $0x68] sm:$0xff]
      %v334 = vld [vmem:[#allocation2 + $0x70] sm:$0xff]
      %v335 = vld [vmem:[#allocation2 + $0x78] sm:$0xff]
      %336 = vst [vmem:[#allocation8] sm:$0xff] %v320
      %337 = vst [vmem:[#allocation8 + $0x8] sm:$0xff] %v321
      %338 = vst [vmem:[#allocation8 + $0x10] sm:$0xff] %v322
      %339 = vst [vmem:[#allocation8 + $0x18] sm:$0xff] %v323
      %340 = vst [vmem:[#allocation8 + $0x20] sm:$0xff] %v324
      %341 = vst [vmem:[#allocation8 + $0x28] sm:$0xff] %v325
      %342 = vst [vmem:[#allocation8 + $0x30] sm:$0xff] %v326
      %343 = vst [vmem:[#allocation8 + $0x38] sm:$0xff] %v327
      %344 = vst [vmem:[#allocation8 + $0x40] sm:$0xff] %v328
      %345 = vst [vmem:[#allocation8 + $0x48] sm:$0xff] %v329
      %346 = vst [vmem:[#allocation8 + $0x50] sm:$0xff] %v330
      %347 = vst [vmem:[#allocation8 + $0x58] sm:$0xff] %v331
      %348 = vst [vmem:[#allocation8 + $0x60] sm:$0xff] %v332
      %349 = vst [vmem:[#allocation8 + $0x68] sm:$0xff] %v333
      %350 = vst [vmem:[#allocation8 + $0x70] sm:$0xff] %v334
      %351 = vst [vmem:[#allocation8 + $0x78] sm:$0xff] %v335
    $region25: #{tpu_custom_call.1} parent=1 // pred_fallthru
      _
    // Predicated region
    $region26: #{tpu_custom_call.1} parent=1 // pred_check
      _
    $region27: #{tpu_custom_call.1} parent=1 // pred_check_branch
      %353 = sbr.rel (0) target = $region29
    $region28: #{tpu_custom_call.1} parent=1 // pred_region
      %s355 = ssub.s32 2048, 2048
      %356 = vsyncadd [#allocation5], %s355
      %s357 = sshll.u32 [#allocation8], 4
      %s358 = int_to_ptr.vmem [resolvable:$true] %s357
      %363 = dma.vmem_to_hbm [thread:$0]  %s358, 2048, %s2, [#allocation5], 128, 128, 8
    $region29: #{tpu_custom_call.1} parent=1 // pred_fallthru
      _
    // Predicated region
    $region30: #{tpu_custom_call.1} parent=1 // pred_check
      _
    $region31: #{tpu_custom_call.1} parent=1 // pred_check_branch
      %365 = sbr.rel (0) target = $region33
    $region32: #{tpu_custom_call.1} parent=1 // pred_region
      %366 = dma.done [#allocation5], 2048
    $region33: #{tpu_custom_call.1} parent=1 // pred_fallthru
      _
    %367 = vsyncpa [#allocation4], 1
    %368 = vsyncpa [#allocation7], 1
    %369 = vsyncpa [#allocation5], 1

</llo_original>
